<compile_context>
chip_gen: v7x
topology: tpu7x:2x2x1
jax: 0.10.0
libtpu: 0.0.40
codegen_flags: <defaults>
</compile_context>

<pallas_src>
import jax
import jax.numpy as jnp
from jax.experimental import pallas as pl
from jax.experimental.pallas import tpu as pltpu


def _lin_sigmoid_kernel(x_ref, w_ref, b_ref, o_ref):
    # x_ref: (TB, D) VMEM; w_ref: (1, D) VMEM; b_ref: (1,) SMEM; o_ref: (1, TB) VMEM
    prod = x_ref[...] * w_ref[...]            # (TB, D): VPU elementwise, weight row broadcast
    y = jnp.sum(prod, axis=-1)                # (TB,)  : XLU lane reduction
    y = y + b_ref[0]                          # scalar bias from SMEM
    o_ref[...] = jax.nn.sigmoid(y)[None, :].astype(o_ref.dtype)   # lane-dense (1, TB) store


def _pick_tile_b(batch, features, *, vmem_budget_bytes=12 * 1024 * 1024):
    """Largest power-of-two multiple of 128 that divides `batch`, whose double-buffered
    x tile fits the VMEM budget, and (when possible) leaves >= 2 grid steps so the
    'parallel' axis can shard across both v7x TensorCores."""
    if batch % 128 != 0:
        # Fallback: one full-batch block (block dims == full dims is always legal).
        return batch
    bytes_per_row = 4 * features                                    # f32 rows of x
    max_rows = max(128, vmem_budget_bytes // (2 * bytes_per_row))   # 2x: double buffering
    tile = 128
    while (tile * 2 <= max_rows
           and batch % (tile * 2) == 0
           and tile * 2 <= batch // 2):
        tile *= 2
    return tile


def lin_forward(x, w_row, b, *, tile_b=None):
    """x: (B, D) f32 linearized features; w_row: (1, D) (PyTorch lin1.weight layout);
    b: (1,) bias. Returns sigmoid(x @ w_row.T + b) with shape (B, 1)."""
    B, D = x.shape
    assert w_row.shape == (1, D) and b.shape == (1,)
    if tile_b is None:
        tile_b = _pick_tile_b(B, D)
    assert B % tile_b == 0, "pad the batch or pass a tile_b that divides B"

    out_row = pl.pallas_call(
        _lin_sigmoid_kernel,
        out_shape=jax.ShapeDtypeStruct((1, B), x.dtype),
        grid_spec=pltpu.PrefetchScalarGridSpec(
            num_scalar_prefetch=0,
            grid=(B // tile_b,),
            in_specs=[
                pl.BlockSpec((tile_b, D), lambda i: (i, 0)),        # x tiles (streamed)
                pl.BlockSpec((1, D), lambda i: (0, 0)),             # weight row (resident)
                pl.BlockSpec(memory_space=pltpu.MemorySpace.SMEM),  # bias scalar in SMEM
            ],
            out_specs=pl.BlockSpec((1, tile_b), lambda i: (0, i)),  # lane-dense output row
        ),
        compiler_params=pltpu.CompilerParams(
            dimension_semantics=("parallel",),
            vmem_limit_bytes=32 * 1024 * 1024,
        ),
    )(x, w_row, b)
    return out_row.reshape(B, 1)


def init_lin_params(key, input_size):
    """nn.Linear(input_size, 1) default init: U(-1/sqrt(D), 1/sqrt(D))."""
    kw, kb = jax.random.split(key)
    bound = 1.0 / (input_size ** 0.5)
    w_row = jax.random.uniform(kw, (1, input_size), jnp.float32, -bound, bound)
    b = jax.random.uniform(kb, (1,), jnp.float32, -bound, bound)
    return w_row, b


if __name__ == "__main__":
    key = jax.random.PRNGKey(0)
    k_x, k_p = jax.random.split(key)

    # Small shapes consistent with the module: lin1 takes 128 * hid_channels features.
    hid_channels = 8                      # reduced from the default 64 to stay small
    batch = 256                           # gives a 2-step grid with tile_b = 128
    input_size = 128 * hid_channels       # 1024

    x = jax.random.normal(k_x, (batch, input_size), jnp.float32)
    w_row, b = init_lin_params(k_p, input_size)

    out = lin_forward(x, w_row, b)
    jax.block_until_ready(out)

    # Reference in plain JAX (f32 throughout, same math as torch: sigmoid(x @ W^T + b)).
    ref = jax.nn.sigmoid(jnp.sum(x * w_row, axis=-1, keepdims=True) + b)
    assert out.shape == (batch, 1)
    assert jnp.allclose(out, ref, atol=1e-5), "mismatch vs reference"

    print("KERNEL_OK")
</pallas_src>

<mosaic_0001>
module attributes {stable_mosaic.version = 11 : i64} {
  func.func @_lin_sigmoid_kernel(%arg0: i32, %arg1: memref<128x1024xf32, #tpu.memory_space<vmem>>, %arg2: memref<1x1024xf32, #tpu.memory_space<vmem>>, %arg3: memref<1xf32, #tpu.memory_space<smem>>, %arg4: memref<1x128xf32, #tpu.memory_space<vmem>>) attributes {dimension_semantics = [#tpu.dimension_semantics<parallel>], iteration_bounds = array<i64: 2>, scalar_prefetch = 0 : i64, scratch_operands = 0 : i64, tpu.core_type = #tpu.core_type<tc>, window_params = [{transform_indices = @transform_0, window_bounds = array<i64: 128, 1024>}, {pipeline_mode = #tpu.pipeline_mode<synchronous>, transform_indices = @transform_1, window_bounds = array<i64: 1, 1024>}, {transform_indices = @transform_2, window_bounds = array<i64: 1>}, {transform_indices = @transform_3, window_bounds = array<i64: 1, 128>}]} {
    %c0 = arith.constant 0 : index
    %c0_0 = arith.constant 0 : index
    %0 = vector.load %arg1[%c0, %c0_0] : memref<128x1024xf32, #tpu.memory_space<vmem>>, vector<128x1024xf32>
    %c0_1 = arith.constant 0 : index
    %c0_2 = arith.constant 0 : index
    %1 = vector.load %arg2[%c0_1, %c0_2] : memref<1x1024xf32, #tpu.memory_space<vmem>>, vector<1x1024xf32>
    %2 = vector.broadcast %1 : vector<1x1024xf32> to vector<128x1024xf32>
    %3 = arith.mulf %0, %2 : vector<128x1024xf32>
    %cst = arith.constant dense<0.000000e+00> : vector<128xf32>
    %4 = vector.multi_reduction <add>, %3, %cst [1] : vector<128x1024xf32> to vector<128xf32>
    %c0_3 = arith.constant 0 : index
    %5 = memref.load %arg3[%c0_3] : memref<1xf32, #tpu.memory_space<smem>>
    %6 = vector.broadcast %5 : f32 to vector<128xf32>
    %7 = arith.addf %4, %6 : vector<128xf32>
    %8 = arith.negf %7 : vector<128xf32>
    %9 = math.exp %8 : vector<128xf32>
    %cst_4 = arith.constant 1.000000e+00 : f32
    %10 = vector.broadcast %cst_4 : f32 to vector<128xf32>
    %11 = arith.addf %10, %9 : vector<128xf32>
    %12 = arith.divf %10, %11 : vector<128xf32>
    %13 = vector.shape_cast %12 : vector<128xf32> to vector<1x128xf32>
    %c0_5 = arith.constant 0 : index
    %c0_6 = arith.constant 0 : index
    %14 = vector.load %arg4[%c0_5, %c0_6] : memref<1x128xf32, #tpu.memory_space<vmem>>, vector<1x128xf32>
    tpu.vector_store %arg4[%c0_5, %c0_6], %13 {strides = array<i32>} : memref<1x128xf32, #tpu.memory_space<vmem>>, vector<1x128xf32>,
    return
  }
  func.func @transform_0(%arg0: i32) -> (i32, i32) {
    %c0_i32 = arith.constant 0 : i32
    %c0_i32_0 = arith.constant 0 : i32
    return %arg0, %c0_i32 : i32, i32
  }
  func.func @transform_1(%arg0: i32) -> (i32, i32) {
    %c0_i32 = arith.constant 0 : i32
    %c0_i32_0 = arith.constant 0 : i32
    %c0_i32_1 = arith.constant 0 : i32
    return %c0_i32, %c0_i32_0 : i32, i32
  }
  func.func @transform_2(%arg0: i32) -> i32 {
    %c0_i32 = arith.constant 0 : i32
    %c0_i32_0 = arith.constant 0 : i32
    return %c0_i32 : i32
  }
  func.func @transform_3(%arg0: i32) -> (i32, i32) {
    %c0_i32 = arith.constant 0 : i32
    %c0_i32_0 = arith.constant 0 : i32
    return %c0_i32, %arg0 : i32, i32
  }
}

</mosaic_0001>

<llo_original>
// kernel: tpu_custom_call.1
$region0: #{tpu_custom_call.1}
  #allocation0 [shape = 'u32[]', space=smem, size = 0x4, offset = 0x4, fixed_abs, tag = 'smem constant byte address 0x4 - core index']
  #allocation1 [shape = 'u32[144,128]{1,0:T(1,128)}', space=vmem, size = 0x12000, scoped, tag = 'internal scratch']
  #allocation2 [shape = 'f32[1]{0:T(128)S(6)}', space=smem, size = 0x200, scoped, tag = 'scoped memory for tpu_custom_call.1']
  %s0 = inlined_call_operand.hbm [shape: f32[256,1024], index: 0, kind: input, shape index: {}]
  %s1 = inlined_call_operand.hbm [shape: f32[1,1024], index: 1, kind: input, shape index: {}]
  %s2 = inlined_call_operand.<no memory space> [shape: f32[1], index: 2, kind: input, shape index: {}]
  %s3 = inlined_call_operand.hbm [shape: f32[1,256], index: 3, kind: output, shape index: {}]
  %s4 = sld [smem:[#allocation0]]
  $region53: #{tpu_custom_call.1} parent=0
    _
  %s6 = ssub.s32 1, %s4
  %s7 = scalar_select 0, %s6, %s4
  %8 = sst [smem:[#allocation2]] %s2
  $region1: #{tpu_custom_call.1} parent=0
    #allocation3 [shape = 'u8[1048576]{0}', space=vmem, size = 0x100000, scoped, tag = 'input window, operand 0']
    #allocation4 [shape = 's32[2]{0}', space=sflag, size = 0x8, scoped, tag = 'scoped memory for tpu_custom_call.1']
    #allocation5 [shape = 's32[2]{0}', space=sflag, size = 0x8, scoped, tag = 'scoped memory for tpu_custom_call.1']
    #allocation6 [shape = 'u8[4096]{0}', space=vmem, size = 0x1000, scoped, tag = 'input window, operand 1, single buffered']
    #allocation7 [shape = 's32[1]{0}', space=sflag, size = 0x4, scoped, tag = 'scoped memory for tpu_custom_call.1']
    #allocation8 [shape = 'u8[1024]{0}', space=vmem, size = 0x400, scoped, tag = 'output window, operand 0']
    %9 = vsyncpa [#allocation4], 0
    %s10 = scalar_lea.sflag [#allocation4], 1
    %11 = vsyncpa %s10, 0
    %12 = vsyncpa [#allocation7], 0
    %13 = vsyncpa [#allocation5], 0
    %s14 = scalar_lea.sflag [#allocation5], 1
    %15 = vsyncpa %s14, 0
    loop: start=0, step=1, limit=4
    $region2: #{tpu_custom_call.1} parent=1 // loop_pre_header
      _
    $region3: #{tpu_custom_call.1} parent=1 // loop_header
      %s17 = sphi 0, %s21
      %p18 = scmp.ge.s32.totalorder %s17, 4
      %s27 = sphi 0, %s29
      %s30 = sphi 0, %s27
      %s31 = sphi 0, %s30
      %s47 = sphi 0, %s31
      %s51 = sphi 0, %s51
      %s53 = sphi 0, %s51
      %s54 = sphi 0, %s53
      %s68 = sphi 0, %s54
      %s72 = sphi 0, %s72
      %s74 = sphi 0, %s72
      %s75 = sphi 0, %s74
      %s89 = sphi 0, %s75
      %s95 = sphi 0, %s97
      %s98 = sphi 0, %s95
      %s99 = sphi 0, %s98
      %s115 = sphi 0, %s99
    $region4: #{tpu_custom_call.1} parent=1 // loop_header_branch
      %20 = sbr.rel (%p18) target = $region8
    $region5: #{tpu_custom_call.1} parent=1 // loop_body
      %s22 = ssub.s32 %s17, 1
      %s23 = ssub.s32 %s17, 2
      %s24 = sadd.s32 %s17, 1
      %s25 = ssub.s32 %s17, %s24
      %p26 = scmp.eq.s32.totalorder %s25, 0
      %s28 = sadd.s32 %s27, 1
      %s29 = scalar_select %p26, %s27, %s28
      %p32 = pneg %p26
      %p33 = scmp.eq.s32.totalorder %s17, 1
      %p34 = por %p32, %p33
      %p35 = scmp.ne.s32.totalorder %s27, %s30
      %p36 = scmp.eq.s32.totalorder %s17, 0
      %p37 = por %p35, %p36
      %p38 = scmp.ne.s32.totalorder %s27, %s30
      %p39 = scmp.eq.s32.totalorder %s22, 1
      %p40 = por %p38, %p39
      %p41 = scmp.ne.s32.totalorder %s30, %s31
      %p42 = scmp.eq.s32.totalorder %s22, 0
      %p43 = por %p41, %p42
      %p44 = scmp.ne.s32.totalorder %s30, %s31
      %p45 = scmp.eq.s32.totalorder %s23, 1
      %p46 = por %p44, %p45
      %p48 = scmp.ne.s32.totalorder %s31, %s47
      %p49 = scmp.eq.s32.totalorder %s23, 0
      %p50 = por %p48, %p49
      %s52 = sadd.s32 %s51, 1
      %p55 = scmp.eq.s32.totalorder %s17, 1
      %p56 = scmp.ne.s32.totalorder %s51, %s53
      %p57 = scmp.eq.s32.totalorder %s17, 0
      %p58 = por %p56, %p57
      %p59 = scmp.ne.s32.totalorder %s51, %s53
      %p60 = scmp.eq.s32.totalorder %s22, 1
      %p61 = por %p59, %p60
      %p62 = scmp.ne.s32.totalorder %s53, %s54
      %p63 = scmp.eq.s32.totalorder %s22, 0
      %p64 = por %p62, %p63
      %p65 = scmp.ne.s32.totalorder %s53, %s54
      %p66 = scmp.eq.s32.totalorder %s23, 1
      %p67 = por %p65, %p66
      %p69 = scmp.ne.s32.totalorder %s54, %s68
      %p70 = scmp.eq.s32.totalorder %s23, 0
      %p71 = por %p69, %p70
      %s73 = sadd.s32 %s72, 1
      %p76 = scmp.eq.s32.totalorder %s17, 1
      %p77 = scmp.ne.s32.totalorder %s72, %s74
      %p78 = scmp.eq.s32.totalorder %s17, 0
      %p79 = por %p77, %p78
      %p80 = scmp.ne.s32.totalorder %s72, %s74
      %p81 = scmp.eq.s32.totalorder %s22, 1
      %p82 = por %p80, %p81
      %p83 = scmp.ne.s32.totalorder %s74, %s75
      %p84 = scmp.eq.s32.totalorder %s22, 0
      %p85 = por %p83, %p84
      %p86 = scmp.ne.s32.totalorder %s74, %s75
      %p87 = scmp.eq.s32.totalorder %s23, 1
      %p88 = por %p86, %p87
      %p90 = scmp.ne.s32.totalorder %s75, %s89
      %p91 = scmp.eq.s32.totalorder %s23, 0
      %p92 = por %p90, %p91
      %s93 = ssub.s32 %s17, %s24
      %p94 = scmp.eq.s32.totalorder %s93, 0
      %s96 = sadd.s32 %s95, 1
      %s97 = scalar_select %p94, %s95, %s96
      %p100 = pneg %p94
      %p101 = scmp.eq.s32.totalorder %s17, 1
      %p102 = por %p100, %p101
      %p103 = scmp.ne.s32.totalorder %s95, %s98
      %p104 = scmp.eq.s32.totalorder %s17, 0
      %p105 = por %p103, %p104
      %p106 = scmp.ne.s32.totalorder %s95, %s98
      %p107 = scmp.eq.s32.totalorder %s22, 1
      %p108 = por %p106, %p107
      %p109 = scmp.ne.s32.totalorder %s98, %s99
      %p110 = scmp.eq.s32.totalorder %s22, 0
      %p111 = por %p109, %p110
      %p112 = scmp.ne.s32.totalorder %s98, %s99
      %p113 = scmp.eq.s32.totalorder %s23, 1
      %p114 = por %p112, %p113
      %p116 = scmp.ne.s32.totalorder %s99, %s115
      %p117 = scmp.eq.s32.totalorder %s23, 0
      %p118 = por %p116, %p117
      %p119 = scmp.le.s32.totalorder 1, %s17
      %p120 = scmp.lt.s32.totalorder %s17, 3
      %p121 = pnand %p119, %p120
      %p122 = pneg %p121
      // Predicated region
      $region9: #{tpu_custom_call.1} parent=5 // pred_check
        _
      $region10: #{tpu_custom_call.1} parent=5 // pred_check_branch
        %124 = sbr.rel (%p121) target = $region12
      $region11: #{tpu_custom_call.1} parent=5 // pred_region
        %s125 = ssub.s32 %s17, 1
        // Predicated region
        $region13: #{tpu_custom_call.1} parent=11 // pred_check
          %p126 = pneg %p64
        $region14: #{tpu_custom_call.1} parent=11 // pred_check_branch
          %128 = sbr.rel (%p126) target = $region16
        $region15: #{tpu_custom_call.1} parent=11 // pred_region
          %s130 = ssub.s32 128, 128
          %131 = vsyncadd [#allocation7], %s130
          %s133 = sshll.u32 [#allocation6], 4
          %s134 = int_to_ptr.vmem [resolvable:$true] %s133
          %136 = dma.hbm_to_vmem [thread:$0]  %s1, 128, %s134, [#allocation7]
        $region16: #{tpu_custom_call.1} parent=11 // pred_fallthru
          _
        // Predicated region
        $region17: #{tpu_custom_call.1} parent=11 // pred_check
          %p137 = pneg %p85
        $region18: #{tpu_custom_call.1} parent=11 // pred_check_branch
          %139 = sbr.rel (%p137) target = $region20
        $region19: #{tpu_custom_call.1} parent=11 // pred_region
          _
        $region20: #{tpu_custom_call.1} parent=11 // pred_fallthru
          _
      $region12: #{tpu_custom_call.1} parent=5 // pred_fallthru
        _
      %p140 = scmp.lt.s32.totalorder %s17, 2
      // Predicated region
      $region21: #{tpu_custom_call.1} parent=5 // pred_check
        %p141 = pneg %p140
      $region22: #{tpu_custom_call.1} parent=5 // pred_check_branch
        %143 = sbr.rel (%p141) target = $region24
      $region23: #{tpu_custom_call.1} parent=5 // pred_region
        // Predicated region
        $region25: #{tpu_custom_call.1} parent=23 // pred_check
          %p144 = pneg %p37
        $region26: #{tpu_custom_call.1} parent=23 // pred_check_branch
          %146 = sbr.rel (%p144) target = $region28
        $region27: #{tpu_custom_call.1} parent=23 // pred_region
          %s147 = sand.u32 %s27, 1
          %s148 = scalar_lea.sflag [#allocation4], %s147
          %s149 = sand.u32 %s27, 1
          %s150 = smul.addr %s149, 1024
          %s151 = scalar_lea.vmem [#allocation3], %s150
          %s152 = smul.u32 16, %s17
          %s154 = ssub.s32 16384, 16384
          %155 = vsyncadd %s148, %s154
          %s156 = smul.addr %s152, 8
          %s157 = smul.addr %s156, 128
          %s158 = scalar_lea.hbm %s0, %s157
          %s159 = sshll.u32 %s151, 4
          %s160 = int_to_ptr.vmem [resolvable:$true] %s159
          %165 = dma.hbm_to_vmem [thread:$0]  %s158, 16384, %s160, %s148, 1024, 1024, 64
        $region28: #{tpu_custom_call.1} parent=23 // pred_fallthru
          _
      $region24: #{tpu_custom_call.1} parent=5 // pred_fallthru
        _
      %p166 = scmp.le.s32.totalorder 1, %s17
      %p167 = scmp.lt.s32.totalorder %s17, 3
      %p168 = pnand %p166, %p167
      %p169 = pneg %p168
      // Predicated region
      $region29: #{tpu_custom_call.1} parent=5 // pred_check
        _
      $region30: #{tpu_custom_call.1} parent=5 // pred_check_branch
        %171 = sbr.rel (%p168) target = $region32
      $region31: #{tpu_custom_call.1} parent=5 // pred_region
        %s172 = ssub.s32 %s17, 1
        %s173 = sand.u32 %s30, 1
        %s174 = scalar_lea.sflag [#allocation4], %s173
        %s175 = sand.u32 %s30, 1
        %s176 = smul.addr %s175, 1024
        %s177 = scalar_lea.vmem [#allocation3], %s176
        // Predicated region
        $region33: #{tpu_custom_call.1} parent=31 // pred_check
          %p178 = pneg %p43
        $region34: #{tpu_custom_call.1} parent=31 // pred_check_branch
          %180 = sbr.rel (%p178) target = $region36
        $region35: #{tpu_custom_call.1} parent=31 // pred_region
          %181 = dma.done %s174, 16384
        $region36: #{tpu_custom_call.1} parent=31 // pred_fallthru
          _
        // Predicated region
        $region37: #{tpu_custom_call.1} parent=31 // pred_check
          %p182 = pneg %p64
        $region38: #{tpu_custom_call.1} parent=31 // pred_check_branch
          %184 = sbr.rel (%p182) target = $region40
        $region39: #{tpu_custom_call.1} parent=31 // pred_region
          %185 = dma.done [#allocation7], 128
        $region40: #{tpu_custom_call.1} parent=31 // pred_fallthru
          _
        %s186 = sand.u32 %s30, 1
        %s187 = scalar_lea.sflag [#allocation4], %s186
        %s188 = sand.u32 %s30, 1
        %s189 = smul.addr %s188, 1024
        %s190 = scalar_lea.vmem [#allocation3], %s189
        %p191 = pneg %p43
        %p192 = pneg %p40
        %p193 = pneg %p64
        %p194 = pneg %p61
        %p195 = pneg %p85
        %p196 = pneg %p82
        %p197 = pneg %p111
        %p198 = pneg %p108
        %s199 = sand.u32 %s98, 1
        %s200 = scalar_lea.sflag [#allocation5], %s199
        %s201 = sand.u32 %s98, 1
        %s202 = scalar_lea.vmem [#allocation8], %s201
        %s203 = smul.u32 16, %s22
        %v204 = vld [vmem:[%s177] sm:$0xff]
        %v205 = vld [vmem:[%s177 + $0x8] sm:$0xff]
        %v206 = vld [vmem:[%s177 + $0x10] sm:$0xff]
        %v207 = vld [vmem:[%s177 + $0x18] sm:$0xff]
        %v208 = vld [vmem:[%s177 + $0x20] sm:$0xff]
        %v209 = vld [vmem:[%s177 + $0x28] sm:$0xff]
        %v210 = vld [vmem:[%s177 + $0x30] sm:$0xff]
        %v211 = vld [vmem:[%s177 + $0x38] sm:$0xff]
        %v212 = vld [vmem:[%s177 + $0x40] sm:$0xff]
        %v213 = vld [vmem:[%s177 + $0x48] sm:$0xff]
        %v214 = vld [vmem:[%s177 + $0x50] sm:$0xff]
        %v215 = vld [vmem:[%s177 + $0x58] sm:$0xff]
        %v216 = vld [vmem:[%s177 + $0x60] sm:$0xff]
        %v217 = vld [vmem:[%s177 + $0x68] sm:$0xff]
        %v218 = vld [vmem:[%s177 + $0x70] sm:$0xff]
        %v219 = vld [vmem:[%s177 + $0x78] sm:$0xff]
        %v220 = vld [vmem:[%s177 + $0x80] sm:$0xff]
        %v221 = vld [vmem:[%s177 + $0x88] sm:$0xff]
        %v222 = vld [vmem:[%s177 + $0x90] sm:$0xff]
        %v223 = vld [vmem:[%s177 + $0x98] sm:$0xff]
        %v224 = vld [vmem:[%s177 + $0xa0] sm:$0xff]
        %v225 = vld [vmem:[%s177 + $0xa8] sm:$0xff]
        %v226 = vld [vmem:[%s177 + $0xb0] sm:$0xff]
        %v227 = vld [vmem:[%s177 + $0xb8] sm:$0xff]
        %v228 = vld [vmem:[%s177 + $0xc0] sm:$0xff]
        %v229 = vld [vmem:[%s177 + $0xc8] sm:$0xff]
        %v230 = vld [vmem:[%s177 + $0xd0] sm:$0xff]
        %v231 = vld [vmem:[%s177 + $0xd8] sm:$0xff]
        %v232 = vld [vmem:[%s177 + $0xe0] sm:$0xff]
        %v233 = vld [vmem:[%s177 + $0xe8] sm:$0xff]
        %v234 = vld [vmem:[%s177 + $0xf0] sm:$0xff]
        %v235 = vld [vmem:[%s177 + $0xf8] sm:$0xff]
        %v236 = vld [vmem:[%s177 + $0x100] sm:$0xff]
        %v237 = vld [vmem:[%s177 + $0x108] sm:$0xff]
        %v238 = vld [vmem:[%s177 + $0x110] sm:$0xff]
        %v239 = vld [vmem:[%s177 + $0x118] sm:$0xff]
        %v240 = vld [vmem:[%s177 + $0x120] sm:$0xff]
        %v241 = vld [vmem:[%s177 + $0x128] sm:$0xff]
        %v242 = vld [vmem:[%s177 + $0x130] sm:$0xff]
        %v243 = vld [vmem:[%s177 + $0x138] sm:$0xff]
        %v244 = vld [vmem:[%s177 + $0x140] sm:$0xff]
        %v245 = vld [vmem:[%s177 + $0x148] sm:$0xff]
        %v246 = vld [vmem:[%s177 + $0x150] sm:$0xff]
        %v247 = vld [vmem:[%s177 + $0x158] sm:$0xff]
        %v248 = vld [vmem:[%s177 + $0x160] sm:$0xff]
        %v249 = vld [vmem:[%s177 + $0x168] sm:$0xff]
        %v250 = vld [vmem:[%s177 + $0x170] sm:$0xff]
        %v251 = vld [vmem:[%s177 + $0x178] sm:$0xff]
        %v252 = vld [vmem:[%s177 + $0x180] sm:$0xff]
        %v253 = vld [vmem:[%s177 + $0x188] sm:$0xff]
        %v254 = vld [vmem:[%s177 + $0x190] sm:$0xff]
        %v255 = vld [vmem:[%s177 + $0x198] sm:$0xff]
        %v256 = vld [vmem:[%s177 + $0x1a0] sm:$0xff]
        %v257 = vld [vmem:[%s177 + $0x1a8] sm:$0xff]
        %v258 = vld [vmem:[%s177 + $0x1b0] sm:$0xff]
        %v259 = vld [vmem:[%s177 + $0x1b8] sm:$0xff]
        %v260 = vld [vmem:[%s177 + $0x1c0] sm:$0xff]
        %v261 = vld [vmem:[%s177 + $0x1c8] sm:$0xff]
        %v262 = vld [vmem:[%s177 + $0x1d0] sm:$0xff]
        %v263 = vld [vmem:[%s177 + $0x1d8] sm:$0xff]
        %v264 = vld [vmem:[%s177 + $0x1e0] sm:$0xff]
        %v265 = vld [vmem:[%s177 + $0x1e8] sm:$0xff]
        %v266 = vld [vmem:[%s177 + $0x1f0] sm:$0xff]
        %v267 = vld [vmem:[%s177 + $0x1f8] sm:$0xff]
        %v268 = vld [vmem:[%s177 + $0x200] sm:$0xff]
        %v269 = vld [vmem:[%s177 + $0x208] sm:$0xff]
        %v270 = vld [vmem:[%s177 + $0x210] sm:$0xff]
        %v271 = vld [vmem:[%s177 + $0x218] sm:$0xff]
        %v272 = vld [vmem:[%s177 + $0x220] sm:$0xff]
        %v273 = vld [vmem:[%s177 + $0x228] sm:$0xff]
        %v274 = vld [vmem:[%s177 + $0x230] sm:$0xff]
        %v275 = vld [vmem:[%s177 + $0x238] sm:$0xff]
        %v276 = vld [vmem:[%s177 + $0x240] sm:$0xff]
        %v277 = vld [vmem:[%s177 + $0x248] sm:$0xff]
        %v278 = vld [vmem:[%s177 + $0x250] sm:$0xff]
        %v279 = vld [vmem:[%s177 + $0x258] sm:$0xff]
        %v280 = vld [vmem:[%s177 + $0x260] sm:$0xff]
        %v281 = vld [vmem:[%s177 + $0x268] sm:$0xff]
        %v282 = vld [vmem:[%s177 + $0x270] sm:$0xff]
        %v283 = vld [vmem:[%s177 + $0x278] sm:$0xff]
        %v284 = vld [vmem:[%s177 + $0x280] sm:$0xff]
        %v285 = vld [vmem:[%s177 + $0x288] sm:$0xff]
        %v286 = vld [vmem:[%s177 + $0x290] sm:$0xff]
        %v287 = vld [vmem:[%s177 + $0x298] sm:$0xff]
        %v288 = vld [vmem:[%s177 + $0x2a0] sm:$0xff]
        %v289 = vld [vmem:[%s177 + $0x2a8] sm:$0xff]
        %v290 = vld [vmem:[%s177 + $0x2b0] sm:$0xff]
        %v291 = vld [vmem:[%s177 + $0x2b8] sm:$0xff]
        %v292 = vld [vmem:[%s177 + $0x2c0] sm:$0xff]
        %v293 = vld [vmem:[%s177 + $0x2c8] sm:$0xff]
        %v294 = vld [vmem:[%s177 + $0x2d0] sm:$0xff]
        %v295 = vld [vmem:[%s177 + $0x2d8] sm:$0xff]
        %v296 = vld [vmem:[%s177 + $0x2e0] sm:$0xff]
        %v297 = vld [vmem:[%s177 + $0x2e8] sm:$0xff]
        %v298 = vld [vmem:[%s177 + $0x2f0] sm:$0xff]
        %v299 = vld [vmem:[%s177 + $0x2f8] sm:$0xff]
        %v300 = vld [vmem:[%s177 + $0x300] sm:$0xff]
        %v301 = vld [vmem:[%s177 + $0x308] sm:$0xff]
        %v302 = vld [vmem:[%s177 + $0x310] sm:$0xff]
        %v303 = vld [vmem:[%s177 + $0x318] sm:$0xff]
        %v304 = vld [vmem:[%s177 + $0x320] sm:$0xff]
        %v305 = vld [vmem:[%s177 + $0x328] sm:$0xff]
        %v306 = vld [vmem:[%s177 + $0x330] sm:$0xff]
        %v307 = vld [vmem:[%s177 + $0x338] sm:$0xff]
        %v308 = vld [vmem:[%s177 + $0x340] sm:$0xff]
        %v309 = vld [vmem:[%s177 + $0x348] sm:$0xff]
        %v310 = vld [vmem:[%s177 + $0x350] sm:$0xff]
        %v311 = vld [vmem:[%s177 + $0x358] sm:$0xff]
        %v312 = vld [vmem:[%s177 + $0x360] sm:$0xff]
        %v313 = vld [vmem:[%s177 + $0x368] sm:$0xff]
        %v314 = vld [vmem:[%s177 + $0x370] sm:$0xff]
        %v315 = vld [vmem:[%s177 + $0x378] sm:$0xff]
        %v316 = vld [vmem:[%s177 + $0x380] sm:$0xff]
        %v317 = vld [vmem:[%s177 + $0x388] sm:$0xff]
        %v318 = vld [vmem:[%s177 + $0x390] sm:$0xff]
        %v319 = vld [vmem:[%s177 + $0x398] sm:$0xff]
        %v320 = vld [vmem:[%s177 + $0x3a0] sm:$0xff]
        %v321 = vld [vmem:[%s177 + $0x3a8] sm:$0xff]
        %v322 = vld [vmem:[%s177 + $0x3b0] sm:$0xff]
        %v323 = vld [vmem:[%s177 + $0x3b8] sm:$0xff]
        %v324 = vld [vmem:[%s177 + $0x3c0] sm:$0xff]
        %v325 = vld [vmem:[%s177 + $0x3c8] sm:$0xff]
        %v326 = vld [vmem:[%s177 + $0x3d0] sm:$0xff]
        %v327 = vld [vmem:[%s177 + $0x3d8] sm:$0xff]
        %v328 = vld [vmem:[%s177 + $0x3e0] sm:$0xff]
        %v329 = vld [vmem:[%s177 + $0x3e8] sm:$0xff]
        %v330 = vld [vmem:[%s177 + $0x3f0] sm:$0xff]
        %v331 = vld [vmem:[%s177 + $0x3f8] sm:$0xff]
        %v332 = vld [vmem:[#allocation6] sm:$0xff]
        %v334 = vlaneseq
        %v335 = vshrl.u32 %v334, 7
        %v336 = vsub.s32 0, %v335
        %v337 = vrot.slane %v332, %v336
        %v338 = vlaneseq
        %v339 = vshrl.u32 %v338, 7
        %v340 = vsub.s32 1, %v339
        %v341 = vrot.slane %v332, %v340
        %v342 = vlaneseq
        %v343 = vshrl.u32 %v342, 7
        %v344 = vsub.s32 2, %v343
        %v345 = vrot.slane %v332, %v344
        %v346 = vlaneseq
        %v347 = vshrl.u32 %v346, 7
        %v348 = vsub.s32 3, %v347
        %v349 = vrot.slane %v332, %v348
        %v350 = vlaneseq
        %v351 = vshrl.u32 %v350, 7
        %v352 = vsub.s32 4, %v351
        %v353 = vrot.slane %v332, %v352
        %v354 = vlaneseq
        %v355 = vshrl.u32 %v354, 7
        %v356 = vsub.s32 5, %v355
        %v357 = vrot.slane %v332, %v356
        %v358 = vlaneseq
        %v359 = vshrl.u32 %v358, 7
        %v360 = vsub.s32 6, %v359
        %v361 = vrot.slane %v332, %v360
        %v362 = vlaneseq
        %v363 = vshrl.u32 %v362, 7
        %v364 = vsub.s32 7, %v363
        %v365 = vrot.slane %v332, %v364
        %v374 = vmul.f32 %v204, %v337
        %v375 = vmul.f32 %v205, %v341
        %v376 = vmul.f32 %v206, %v345
        %v377 = vmul.f32 %v207, %v349
        %v378 = vmul.f32 %v208, %v353
        %v379 = vmul.f32 %v209, %v357
        %v380 = vmul.f32 %v210, %v361
        %v381 = vmul.f32 %v211, %v365
        %v382 = vmul.f32 %v212, %v337
        %v383 = vmul.f32 %v213, %v341
        %v384 = vmul.f32 %v214, %v345
        %v385 = vmul.f32 %v215, %v349
        %v386 = vmul.f32 %v216, %v353
        %v387 = vmul.f32 %v217, %v357
        %v388 = vmul.f32 %v218, %v361
        %v389 = vmul.f32 %v219, %v365
        %v390 = vmul.f32 %v220, %v337
        %v391 = vmul.f32 %v221, %v341
        %v392 = vmul.f32 %v222, %v345
        %v393 = vmul.f32 %v223, %v349
        %v394 = vmul.f32 %v224, %v353
        %v395 = vmul.f32 %v225, %v357
        %v396 = vmul.f32 %v226, %v361
        %v397 = vmul.f32 %v227, %v365
        %v398 = vmul.f32 %v228, %v337
        %v399 = vmul.f32 %v229, %v341
        %v400 = vmul.f32 %v230, %v345
        %v401 = vmul.f32 %v231, %v349
        %v402 = vmul.f32 %v232, %v353
        %v403 = vmul.f32 %v233, %v357
        %v404 = vmul.f32 %v234, %v361
        %v405 = vmul.f32 %v235, %v365
        %v406 = vmul.f32 %v236, %v337
        %v407 = vmul.f32 %v237, %v341
        %v408 = vmul.f32 %v238, %v345
        %v409 = vmul.f32 %v239, %v349
        %v410 = vmul.f32 %v240, %v353
        %v411 = vmul.f32 %v241, %v357
        %v412 = vmul.f32 %v242, %v361
        %v413 = vmul.f32 %v243, %v365
        %v414 = vmul.f32 %v244, %v337
        %v415 = vmul.f32 %v245, %v341
        %v416 = vmul.f32 %v246, %v345
        %v417 = vmul.f32 %v247, %v349
        %v418 = vmul.f32 %v248, %v353
        %v419 = vmul.f32 %v249, %v357
        %v420 = vmul.f32 %v250, %v361
        %v421 = vmul.f32 %v251, %v365
        %v422 = vmul.f32 %v252, %v337
        %v423 = vmul.f32 %v253, %v341
        %v424 = vmul.f32 %v254, %v345
        %v425 = vmul.f32 %v255, %v349
        %v426 = vmul.f32 %v256, %v353
        %v427 = vmul.f32 %v257, %v357
        %v428 = vmul.f32 %v258, %v361
        %v429 = vmul.f32 %v259, %v365
        %v430 = vmul.f32 %v260, %v337
        %v431 = vmul.f32 %v261, %v341
        %v432 = vmul.f32 %v262, %v345
        %v433 = vmul.f32 %v263, %v349
        %v434 = vmul.f32 %v264, %v353
        %v435 = vmul.f32 %v265, %v357
        %v436 = vmul.f32 %v266, %v361
        %v437 = vmul.f32 %v267, %v365
        %v438 = vmul.f32 %v268, %v337
        %v439 = vmul.f32 %v269, %v341
        %v440 = vmul.f32 %v270, %v345
        %v441 = vmul.f32 %v271, %v349
        %v442 = vmul.f32 %v272, %v353
        %v443 = vmul.f32 %v273, %v357
        %v444 = vmul.f32 %v274, %v361
        %v445 = vmul.f32 %v275, %v365
        %v446 = vmul.f32 %v276, %v337
        %v447 = vmul.f32 %v277, %v341
        %v448 = vmul.f32 %v278, %v345
        %v449 = vmul.f32 %v279, %v349
        %v450 = vmul.f32 %v280, %v353
        %v451 = vmul.f32 %v281, %v357
        %v452 = vmul.f32 %v282, %v361
        %v453 = vmul.f32 %v283, %v365
        %v454 = vmul.f32 %v284, %v337
        %v455 = vmul.f32 %v285, %v341
        %v456 = vmul.f32 %v286, %v345
        %v457 = vmul.f32 %v287, %v349
        %v458 = vmul.f32 %v288, %v353
        %v459 = vmul.f32 %v289, %v357
        %v460 = vmul.f32 %v290, %v361
        %v461 = vmul.f32 %v291, %v365
        %v462 = vmul.f32 %v292, %v337
        %v463 = vmul.f32 %v293, %v341
        %v464 = vmul.f32 %v294, %v345
        %v465 = vmul.f32 %v295, %v349
        %v466 = vmul.f32 %v296, %v353
        %v467 = vmul.f32 %v297, %v357
        %v468 = vmul.f32 %v298, %v361
        %v469 = vmul.f32 %v299, %v365
        %v470 = vmul.f32 %v300, %v337
        %v471 = vmul.f32 %v301, %v341
        %v472 = vmul.f32 %v302, %v345
        %v473 = vmul.f32 %v303, %v349
        %v474 = vmul.f32 %v304, %v353
        %v475 = vmul.f32 %v305, %v357
        %v476 = vmul.f32 %v306, %v361
        %v477 = vmul.f32 %v307, %v365
        %v478 = vmul.f32 %v308, %v337
        %v479 = vmul.f32 %v309, %v341
        %v480 = vmul.f32 %v310, %v345
        %v481 = vmul.f32 %v311, %v349
        %v482 = vmul.f32 %v312, %v353
        %v483 = vmul.f32 %v313, %v357
        %v484 = vmul.f32 %v314, %v361
        %v485 = vmul.f32 %v315, %v365
        %v486 = vmul.f32 %v316, %v337
        %v487 = vmul.f32 %v317, %v341
        %v488 = vmul.f32 %v318, %v345
        %v489 = vmul.f32 %v319, %v349
        %v490 = vmul.f32 %v320, %v353
        %v491 = vmul.f32 %v321, %v357
        %v492 = vmul.f32 %v322, %v361
        %v493 = vmul.f32 %v323, %v365
        %v494 = vmul.f32 %v324, %v337
        %v495 = vmul.f32 %v325, %v341
        %v496 = vmul.f32 %v326, %v345
        %v497 = vmul.f32 %v327, %v349
        %v498 = vmul.f32 %v328, %v353
        %v499 = vmul.f32 %v329, %v357
        %v500 = vmul.f32 %v330, %v361
        %v501 = vmul.f32 %v331, %v365
        %v502 = vadd.f32 %v374, %v375
        %v503 = vadd.f32 %v502, %v376
        %v504 = vadd.f32 %v503, %v377
        %v505 = vadd.f32 %v504, %v378
        %v506 = vadd.f32 %v505, %v379
        %v507 = vadd.f32 %v506, %v380
        %v508 = vadd.f32 %v507, %v381
        %509 = vadd.xlane.f32.xlu0 %v508
        %v510 = vpop.xlane.xlu0 %509
        %v511 = vadd.f32 %v382, %v383
        %v512 = vadd.f32 %v511, %v384
        %v513 = vadd.f32 %v512, %v385
        %v514 = vadd.f32 %v513, %v386
        %v515 = vadd.f32 %v514, %v387
        %v516 = vadd.f32 %v515, %v388
        %v517 = vadd.f32 %v516, %v389
        %518 = vadd.xlane.f32.xlu0 %v517
        %v519 = vpop.xlane.xlu0 %518
        %v520 = vadd.f32 %v390, %v391
        %v521 = vadd.f32 %v520, %v392
        %v522 = vadd.f32 %v521, %v393
        %v523 = vadd.f32 %v522, %v394
        %v524 = vadd.f32 %v523, %v395
        %v525 = vadd.f32 %v524, %v396
        %v526 = vadd.f32 %v525, %v397
        %527 = vadd.xlane.f32.xlu0 %v526
        %v528 = vpop.xlane.xlu0 %527
        %v529 = vadd.f32 %v398, %v399
        %v530 = vadd.f32 %v529, %v400
        %v531 = vadd.f32 %v530, %v401
        %v532 = vadd.f32 %v531, %v402
        %v533 = vadd.f32 %v532, %v403
        %v534 = vadd.f32 %v533, %v404
        %v535 = vadd.f32 %v534, %v405
        %536 = vadd.xlane.f32.xlu0 %v535
        %v537 = vpop.xlane.xlu0 %536
        %v538 = vadd.f32 %v406, %v407
        %v539 = vadd.f32 %v538, %v408
        %v540 = vadd.f32 %v539, %v409
        %v541 = vadd.f32 %v540, %v410
        %v542 = vadd.f32 %v541, %v411
        %v543 = vadd.f32 %v542, %v412
        %v544 = vadd.f32 %v543, %v413
        %545 = vadd.xlane.f32.xlu0 %v544
        %v546 = vpop.xlane.xlu0 %545
        %v547 = vadd.f32 %v414, %v415
        %v548 = vadd.f32 %v547, %v416
        %v549 = vadd.f32 %v548, %v417
        %v550 = vadd.f32 %v549, %v418
        %v551 = vadd.f32 %v550, %v419
        %v552 = vadd.f32 %v551, %v420
        %v553 = vadd.f32 %v552, %v421
        %554 = vadd.xlane.f32.xlu0 %v553
        %v555 = vpop.xlane.xlu0 %554
        %v556 = vadd.f32 %v422, %v423
        %v557 = vadd.f32 %v556, %v424
        %v558 = vadd.f32 %v557, %v425
        %v559 = vadd.f32 %v558, %v426
        %v560 = vadd.f32 %v559, %v427
        %v561 = vadd.f32 %v560, %v428
        %v562 = vadd.f32 %v561, %v429
        %563 = vadd.xlane.f32.xlu0 %v562
        %v564 = vpop.xlane.xlu0 %563
        %v565 = vadd.f32 %v430, %v431
        %v566 = vadd.f32 %v565, %v432
        %v567 = vadd.f32 %v566, %v433
        %v568 = vadd.f32 %v567, %v434
        %v569 = vadd.f32 %v568, %v435
        %v570 = vadd.f32 %v569, %v436
        %v571 = vadd.f32 %v570, %v437
        %572 = vadd.xlane.f32.xlu0 %v571
        %v573 = vpop.xlane.xlu0 %572
        %v574 = vadd.f32 %v438, %v439
        %v575 = vadd.f32 %v574, %v440
        %v576 = vadd.f32 %v575, %v441
        %v577 = vadd.f32 %v576, %v442
        %v578 = vadd.f32 %v577, %v443
        %v579 = vadd.f32 %v578, %v444
        %v580 = vadd.f32 %v579, %v445
        %581 = vadd.xlane.f32.xlu0 %v580
        %v582 = vpop.xlane.xlu0 %581
        %v583 = vadd.f32 %v446, %v447
        %v584 = vadd.f32 %v583, %v448
        %v585 = vadd.f32 %v584, %v449
        %v586 = vadd.f32 %v585, %v450
        %v587 = vadd.f32 %v586, %v451
        %v588 = vadd.f32 %v587, %v452
        %v589 = vadd.f32 %v588, %v453
        %590 = vadd.xlane.f32.xlu0 %v589
        %v591 = vpop.xlane.xlu0 %590
        %v592 = vadd.f32 %v454, %v455
        %v593 = vadd.f32 %v592, %v456
        %v594 = vadd.f32 %v593, %v457
        %v595 = vadd.f32 %v594, %v458
        %v596 = vadd.f32 %v595, %v459
        %v597 = vadd.f32 %v596, %v460
        %v598 = vadd.f32 %v597, %v461
        %599 = vadd.xlane.f32.xlu0 %v598
        %v600 = vpop.xlane.xlu0 %599
        %v601 = vadd.f32 %v462, %v463
        %v602 = vadd.f32 %v601, %v464
        %v603 = vadd.f32 %v602, %v465
        %v604 = vadd.f32 %v603, %v466
        %v605 = vadd.f32 %v604, %v467
        %v606 = vadd.f32 %v605, %v468
        %v607 = vadd.f32 %v606, %v469
        %608 = vadd.xlane.f32.xlu0 %v607
        %v609 = vpop.xlane.xlu0 %608
        %v610 = vadd.f32 %v470, %v471
        %v611 = vadd.f32 %v610, %v472
        %v612 = vadd.f32 %v611, %v473
        %v613 = vadd.f32 %v612, %v474
        %v614 = vadd.f32 %v613, %v475
        %v615 = vadd.f32 %v614, %v476
        %v616 = vadd.f32 %v615, %v477
        %617 = vadd.xlane.f32.xlu0 %v616
        %v618 = vpop.xlane.xlu0 %617
        %v619 = vadd.f32 %v478, %v479
        %v620 = vadd.f32 %v619, %v480
        %v621 = vadd.f32 %v620, %v481
        %v622 = vadd.f32 %v621, %v482
        %v623 = vadd.f32 %v622, %v483
        %v624 = vadd.f32 %v623, %v484
        %v625 = vadd.f32 %v624, %v485
        %626 = vadd.xlane.f32.xlu0 %v625
        %v627 = vpop.xlane.xlu0 %626
        %v628 = vadd.f32 %v486, %v487
        %v629 = vadd.f32 %v628, %v488
        %v630 = vadd.f32 %v629, %v489
        %v631 = vadd.f32 %v630, %v490
        %v632 = vadd.f32 %v631, %v491
        %v633 = vadd.f32 %v632, %v492
        %v634 = vadd.f32 %v633, %v493
        %635 = vadd.xlane.f32.xlu0 %v634
        %v636 = vpop.xlane.xlu0 %635
        %v637 = vadd.f32 %v494, %v495
        %v638 = vadd.f32 %v637, %v496
        %v639 = vadd.f32 %v638, %v497
        %v640 = vadd.f32 %v639, %v498
        %v641 = vadd.f32 %v640, %v499
        %v642 = vadd.f32 %v641, %v500
        %v643 = vadd.f32 %v642, %v501
        %644 = vadd.xlane.f32.xlu0 %v643
        %v645 = vpop.xlane.xlu0 %644
        %s646 = sld [smem:[#allocation2]]
        %v647 = vstv %s646
        %v648 = vadd.f32 %v510, %v647
        %v649 = vadd.f32 %v519, %v647
        %v650 = vadd.f32 %v528, %v647
        %v651 = vadd.f32 %v537, %v647
        %v652 = vadd.f32 %v546, %v647
        %v653 = vadd.f32 %v555, %v647
        %v654 = vadd.f32 %v564, %v647
        %v655 = vadd.f32 %v573, %v647
        %v656 = vadd.f32 %v582, %v647
        %v657 = vadd.f32 %v591, %v647
        %v658 = vadd.f32 %v600, %v647
        %v659 = vadd.f32 %v609, %v647
        %v660 = vadd.f32 %v618, %v647
        %v661 = vadd.f32 %v627, %v647
        %v662 = vadd.f32 %v636, %v647
        %v663 = vadd.f32 %v645, %v647
        %v664 = vxor.u32 %v648, 2147483648
        %v665 = vxor.u32 %v649, 2147483648
        %v666 = vxor.u32 %v650, 2147483648
        %v667 = vxor.u32 %v651, 2147483648
        %v668 = vxor.u32 %v652, 2147483648
        %v669 = vxor.u32 %v653, 2147483648
        %v670 = vxor.u32 %v654, 2147483648
        %v671 = vxor.u32 %v655, 2147483648
        %v672 = vxor.u32 %v656, 2147483648
        %v673 = vxor.u32 %v657, 2147483648
        %v674 = vxor.u32 %v658, 2147483648
        %v675 = vxor.u32 %v659, 2147483648
        %v676 = vxor.u32 %v660, 2147483648
        %v677 = vxor.u32 %v661, 2147483648
        %v678 = vxor.u32 %v662, 2147483648
        %v679 = vxor.u32 %v663, 2147483648
        %v680 = vmul.f32 %v664, 1.442695
        %v681 = vpow.pop %v680
        %v682 = vmul.f32 %v665, 1.442695
        %v683 = vpow.pop %v682
        %v684 = vmul.f32 %v666, 1.442695
        %v685 = vpow.pop %v684
        %v686 = vmul.f32 %v667, 1.442695
        %v687 = vpow.pop %v686
        %v688 = vmul.f32 %v668, 1.442695
        %v689 = vpow.pop %v688
        %v690 = vmul.f32 %v669, 1.442695
        %v691 = vpow.pop %v690
        %v692 = vmul.f32 %v670, 1.442695
        %v693 = vpow.pop %v692
        %v694 = vmul.f32 %v671, 1.442695
        %v695 = vpow.pop %v694
        %v696 = vmul.f32 %v672, 1.442695
        %v697 = vpow.pop %v696
        %v698 = vmul.f32 %v673, 1.442695
        %v699 = vpow.pop %v698
        %v700 = vmul.f32 %v674, 1.442695
        %v701 = vpow.pop %v700
        %v702 = vmul.f32 %v675, 1.442695
        %v703 = vpow.pop %v702
        %v704 = vmul.f32 %v676, 1.442695
        %v705 = vpow.pop %v704
        %v706 = vmul.f32 %v677, 1.442695
        %v707 = vpow.pop %v706
        %v708 = vmul.f32 %v678, 1.442695
        %v709 = vpow.pop %v708
        %v710 = vmul.f32 %v679, 1.442695
        %v711 = vpow.pop %v710
        %v712 = vadd.f32 %v681, 1.0
        %v713 = vadd.f32 %v683, 1.0
        %v714 = vadd.f32 %v685, 1.0
        %v715 = vadd.f32 %v687, 1.0
        %v716 = vadd.f32 %v689, 1.0
        %v717 = vadd.f32 %v691, 1.0
        %v718 = vadd.f32 %v693, 1.0
        %v719 = vadd.f32 %v695, 1.0
        %v720 = vadd.f32 %v697, 1.0
        %v721 = vadd.f32 %v699, 1.0
        %v722 = vadd.f32 %v701, 1.0
        %v723 = vadd.f32 %v703, 1.0
        %v724 = vadd.f32 %v705, 1.0
        %v725 = vadd.f32 %v707, 1.0
        %v726 = vadd.f32 %v709, 1.0
        %v727 = vadd.f32 %v711, 1.0
        %v728 = vrcp.pop %v712
        %v729 = vmul.f32 1.0, %v728
        %v730 = vrcp.pop %v713
        %v731 = vmul.f32 1.0, %v730
        %v732 = vrcp.pop %v714
        %v733 = vmul.f32 1.0, %v732
        %v734 = vrcp.pop %v715
        %v735 = vmul.f32 1.0, %v734
        %v736 = vrcp.pop %v716
        %v737 = vmul.f32 1.0, %v736
        %v738 = vrcp.pop %v717
        %v739 = vmul.f32 1.0, %v738
        %v740 = vrcp.pop %v718
        %v741 = vmul.f32 1.0, %v740
        %v742 = vrcp.pop %v719
        %v743 = vmul.f32 1.0, %v742
        %v744 = vrcp.pop %v720
        %v745 = vmul.f32 1.0, %v744
        %v746 = vrcp.pop %v721
        %v747 = vmul.f32 1.0, %v746
        %v748 = vrcp.pop %v722
        %v749 = vmul.f32 1.0, %v748
        %v750 = vrcp.pop %v723
        %v751 = vmul.f32 1.0, %v750
        %v752 = vrcp.pop %v724
        %v753 = vmul.f32 1.0, %v752
        %v754 = vrcp.pop %v725
        %v755 = vmul.f32 1.0, %v754
        %v756 = vrcp.pop %v726
        %v757 = vmul.f32 1.0, %v756
        %v758 = vrcp.pop %v727
        %v759 = vmul.f32 1.0, %v758
        %v776 = vlaneseq
        %v777 = vand.u32 %v776, 127
        %v778 = vlaneseq
        %v779 = vshrl.u32 %v778, 7
        %v780 = vsub.s32 %v777, %v779
        %v781 = vrot.slane %v729, %v780
        %v782 = vadd.s32 %v777, 4294967288
        %v783 = vlaneseq
        %v784 = vshrl.u32 %v783, 7
        %v785 = vsub.s32 %v782, %v784
        %v786 = vrot.slane %v731, %v785
        %vm787 = vcmask 130112
        %v788 = vsel %vm787, %v786, %v781
        %v789 = vadd.s32 %v777, 4294967280
        %v790 = vlaneseq
        %v791 = vshrl.u32 %v790, 7
        %v792 = vsub.s32 %v789, %v791
        %v793 = vrot.slane %v733, %v792
        %vm794 = vcmask 195712
        %v795 = vsel %vm794, %v793, %v788
        %v796 = vadd.s32 %v777, 4294967272
        %v797 = vlaneseq
        %v798 = vshrl.u32 %v797, 7
        %v799 = vsub.s32 %v796, %v798
        %v800 = vrot.slane %v735, %v799
        %vm801 = vcmask 261312
        %v802 = vsel %vm801, %v800, %v795
        %v803 = vadd.s32 %v777, 4294967264
        %v804 = vlaneseq
        %v805 = vshrl.u32 %v804, 7
        %v806 = vsub.s32 %v803, %v805
        %v807 = vrot.slane %v737, %v806
        %vm808 = vcmask 326912
        %v809 = vsel %vm808, %v807, %v802
        %v810 = vadd.s32 %v777, 4294967256
        %v811 = vlaneseq
        %v812 = vshrl.u32 %v811, 7
        %v813 = vsub.s32 %v810, %v812
        %v814 = vrot.slane %v739, %v813
        %vm815 = vcmask 392512
        %v816 = vsel %vm815, %v814, %v809
        %v817 = vadd.s32 %v777, 4294967248
        %v818 = vlaneseq
        %v819 = vshrl.u32 %v818, 7
        %v820 = vsub.s32 %v817, %v819
        %v821 = vrot.slane %v741, %v820
        %vm822 = vcmask 458112
        %v823 = vsel %vm822, %v821, %v816
        %v824 = vadd.s32 %v777, 4294967240
        %v825 = vlaneseq
        %v826 = vshrl.u32 %v825, 7
        %v827 = vsub.s32 %v824, %v826
        %v828 = vrot.slane %v743, %v827
        %vm829 = vcmask 523712
        %v830 = vsel %vm829, %v828, %v823
        %v831 = vadd.s32 %v777, 4294967232
        %v832 = vlaneseq
        %v833 = vshrl.u32 %v832, 7
        %v834 = vsub.s32 %v831, %v833
        %v835 = vrot.slane %v745, %v834
        %vm836 = vcmask 589312
        %v837 = vsel %vm836, %v835, %v830
        %v838 = vadd.s32 %v777, 4294967224
        %v839 = vlaneseq
        %v840 = vshrl.u32 %v839, 7
        %v841 = vsub.s32 %v838, %v840
        %v842 = vrot.slane %v747, %v841
        %vm843 = vcmask 654912
        %v844 = vsel %vm843, %v842, %v837
        %v845 = vadd.s32 %v777, 4294967216
        %v846 = vlaneseq
        %v847 = vshrl.u32 %v846, 7
        %v848 = vsub.s32 %v845, %v847
        %v849 = vrot.slane %v749, %v848
        %vm850 = vcmask 720512
        %v851 = vsel %vm850, %v849, %v844
        %v852 = vadd.s32 %v777, 4294967208
        %v853 = vlaneseq
        %v854 = vshrl.u32 %v853, 7
        %v855 = vsub.s32 %v852, %v854
        %v856 = vrot.slane %v751, %v855
        %vm857 = vcmask 786112
        %v858 = vsel %vm857, %v856, %v851
        %v859 = vadd.s32 %v777, 4294967200
        %v860 = vlaneseq
        %v861 = vshrl.u32 %v860, 7
        %v862 = vsub.s32 %v859, %v861
        %v863 = vrot.slane %v753, %v862
        %vm864 = vcmask 851712
        %v865 = vsel %vm864, %v863, %v858
        %v866 = vadd.s32 %v777, 4294967192
        %v867 = vlaneseq
        %v868 = vshrl.u32 %v867, 7
        %v869 = vsub.s32 %v866, %v868
        %v870 = vrot.slane %v755, %v869
        %vm871 = vcmask 917312
        %v872 = vsel %vm871, %v870, %v865
        %v873 = vadd.s32 %v777, 4294967184
        %v874 = vlaneseq
        %v875 = vshrl.u32 %v874, 7
        %v876 = vsub.s32 %v873, %v875
        %v877 = vrot.slane %v757, %v876
        %vm878 = vcmask 982912
        %v879 = vsel %vm878, %v877, %v872
        %v880 = vadd.s32 %v777, 4294967176
        %v881 = vlaneseq
        %v882 = vshrl.u32 %v881, 7
        %v883 = vsub.s32 %v880, %v882
        %v884 = vrot.slane %v759, %v883
        %vm885 = vcmask 1048512
        %v886 = vsel %vm885, %v884, %v879
        %888 = vst [vmem:[%s202] sm:$0x1] %v886
        %s889 = sand.u32 %s98, 1
        %s890 = scalar_lea.sflag [#allocation5], %s889
        %s891 = sand.u32 %s98, 1
        %s892 = scalar_lea.vmem [#allocation8], %s891
        // Predicated region
        $region41: #{tpu_custom_call.1} parent=31 // pred_check
          %p893 = pneg %p108
        $region42: #{tpu_custom_call.1} parent=31 // pred_check_branch
          %895 = sbr.rel (%p893) target = $region44
        $region43: #{tpu_custom_call.1} parent=31 // pred_region
          %s897 = ssub.s32 16, 16
          %898 = vsyncadd %s890, %s897
          %s899 = smul.addr %s22, 16
          %s900 = scalar_lea.hbm %s3, %s899
          %s902 = sshll.u32 %s892, 4
          %s903 = int_to_ptr.vmem [resolvable:$true] %s902
          %905 = dma.vmem_to_hbm [thread:$0]  %s903, 16, %s900, %s890
        $region44: #{tpu_custom_call.1} parent=31 // pred_fallthru
          _
      $region32: #{tpu_custom_call.1} parent=5 // pred_fallthru
        _
      %p906 = scmp.le.s32.totalorder 2, %s17
      // Predicated region
      $region45: #{tpu_custom_call.1} parent=5 // pred_check
        %p907 = pneg %p906
      $region46: #{tpu_custom_call.1} parent=5 // pred_check_branch
        %909 = sbr.rel (%p907) target = $region48
      $region47: #{tpu_custom_call.1} parent=5 // pred_region
        %s910 = ssub.s32 %s17, 2
        // Predicated region
        $region49: #{tpu_custom_call.1} parent=47 // pred_check
          %p911 = pneg %p114
        $region50: #{tpu_custom_call.1} parent=47 // pred_check_branch
          %913 = sbr.rel (%p911) target = $region52
        $region51: #{tpu_custom_call.1} parent=47 // pred_region
          %s914 = sand.u32 %s99, 1
          %s915 = scalar_lea.sflag [#allocation5], %s914
          %s916 = sand.u32 %s99, 1
          %s917 = scalar_lea.vmem [#allocation8], %s916
          %918 = dma.done %s915, 16
        $region52: #{tpu_custom_call.1} parent=47 // pred_fallthru
          _
      $region48: #{tpu_custom_call.1} parent=5 // pred_fallthru
        _
    $region6: #{tpu_custom_call.1} parent=1 // loop_footer
      %s21 = sadd.s32 1, %s17
    $region7: #{tpu_custom_call.1} parent=1 // loop_footer_branch
      %16 = sbr.rel target = $region3
    $region8: #{tpu_custom_call.1} parent=1 // loop_exit
      _
    %919 = vsyncpa [#allocation4], 1
    %s920 = scalar_lea.sflag [#allocation4], 1
    %921 = vsyncpa %s920, 1
    %922 = vsyncpa [#allocation7], 1
    %923 = vsyncpa [#allocation5], 1
    %s924 = scalar_lea.sflag [#allocation5], 1
    %925 = vsyncpa %s924, 1

</llo_original>
